<compile_context>
chip_gen: v5e
topology: v5e:2x2
jax: 0.10.0
libtpu: 0.0.40
codegen_flags: <defaults>
</compile_context>

<pallas_src>
import jax
import jax.numpy as jnp
from jax.experimental import pallas as pl
from jax.experimental.pallas import tpu as pltpu

N, C, H, W = 2, 8, 16, 16            # batch, channels (in == out), spatial
NH, WC = N * H, W * C                # 32, 128  -> lane-dense packed layout
EPS = 1e-5                           # PyTorch BatchNorm2d default eps
INV_NHW = 1.0 / (N * H * W)


# ----------------------------- kernel helpers -----------------------------

def _channel_fold(t):
    """(NH, WC) -> (1, WC): per-channel sums over batch/H/W.

    Folds the W=16 lane groups with cyclic lane rolls (XLU slot, direction
    irrelevant since all 16 shifts are summed), then reduces sublanes.
    Lane l of the result holds the total for channel (l % C), already
    broadcast across every W group.
    """
    for s in (C, 2 * C, 4 * C, 8 * C):
        t = t + pltpu.roll(t, shift=s, axis=1)
    return jnp.sum(t, axis=0, keepdims=True)


def _bn_relu(y, g_ref, b_ref):
    """Training-mode BatchNorm2d (biased batch var) + ReLU, packed layout."""
    mean = _channel_fold(y) * INV_NHW                 # (1, WC)
    d = y - mean
    var = _channel_fold(d * d) * INV_NHW              # centered two-pass var
    scale = g_ref[...] * jax.lax.rsqrt(var + EPS)     # fold BN into scale/shift
    return jnp.maximum(d * scale + b_ref[...], 0.0)


def _conv3x3(y, p_ref, m_ref):
    """3x3 / stride-1 / pad-1 conv in packed layout.

    p_ref: (2, NH, NH) row-shift matrices (h-1, h+1) with batch-boundary zeros.
    m_ref: (3*WC, WC) stacked lane-mixing matrices (W shift + channel mix per
           H-tap).  One K=384 MXU matmul does the whole convolution.
    """
    zm = jnp.dot(p_ref[0], y, preferred_element_type=jnp.float32)   # rows h-1
    zp = jnp.dot(p_ref[1], y, preferred_element_type=jnp.float32)   # rows h+1
    cat = jnp.concatenate([zm, y, zp], axis=1)                      # (NH, 3*WC)
    return jnp.dot(cat, m_ref[...], preferred_element_type=jnp.float32)


def preact_block_kernel(x_ref, p_ref, m1_ref, m2_ref,
                        g1_ref, b1_ref, g2_ref, b2_ref, o_ref):
    x = x_ref[...]                                    # (NH, WC), lane-dense
    y = _bn_relu(x, g1_ref, b1_ref)
    y = _conv3x3(y, p_ref, m1_ref)
    y = _bn_relu(y, g2_ref, b2_ref)
    y = _conv3x3(y, p_ref, m2_ref)
    o_ref[...] = y + x                                # identity shortcut


# ----------------------------- wrapper helpers -----------------------------

def _build_row_shift():
    """(2, NH, NH): Z[r] = y[r-1] (same image) and Z[r] = y[r+1] (same image)."""
    r = jnp.arange(NH)
    same = (r[:, None] // H) == (r[None, :] // H)
    up = ((r[None, :] == r[:, None] - 1) & same)      # h-1 tap
    dn = ((r[None, :] == r[:, None] + 1) & same)      # h+1 tap
    return jnp.stack([up, dn], axis=0).astype(jnp.float32)


def _build_lane_mixing(w_oihw):
    """OIHW (C,C,3,3) -> (3*W*C, W*C) stacked lane-mixing matrices.

    Block kh maps the packed lanes of the kh-th H-shifted activation
    (w_src*C + ci) to output lanes (w_dst*C + co) with weight
    w[co, ci, kh, w_src - w_dst + 1], zero outside |w_src - w_dst| <= 1
    (this also implements the zero padding along W).
    """
    w = w_oihw.astype(jnp.float32)
    wp = jnp.arange(W)
    dj = wp[:, None] - wp[None, :]                    # w_src - w_dst, (W, W)
    valid = jnp.abs(dj) <= 1
    kw = jnp.clip(dj + 1, 0, 2)
    blocks = []
    for kh in range(3):
        wk = w[:, :, kh, :]                           # (Co, Ci, 3)
        blk = wk[:, :, kw]                            # (Co, Ci, Wsrc, Wdst)
        blk = jnp.where(valid[None, None], blk, 0.0)
        m = jnp.transpose(blk, (2, 1, 3, 0)).reshape(WC, WC)
        blocks.append(m)
    return jnp.concatenate(blocks, axis=0)            # (3*WC, WC)


def preact_residual_block(x_nchw, w1_oihw, w2_oihw, g1, b1, g2, b2):
    """Wrapper: NCHW in / NCHW out, matching the PyTorch module.

    Note: when chaining several residual blocks, keep the packed (NH, WC)
    layout between blocks instead of converting NCHW <-> packed every call.
    """
    x = jnp.transpose(x_nchw, (0, 2, 3, 1)).astype(jnp.float32)      # NHWC
    xp = x.reshape(NH, WC)                                           # lane-dense

    p = _build_row_shift()
    m1 = _build_lane_mixing(w1_oihw)
    m2 = _build_lane_mixing(w2_oihw)
    tile = lambda v: jnp.tile(v.astype(jnp.float32), W).reshape(1, WC)

    out = pl.pallas_call(
        preact_block_kernel,
        out_shape=jax.ShapeDtypeStruct((NH, WC), jnp.float32),
        in_specs=[pl.BlockSpec(memory_space=pltpu.MemorySpace.VMEM)] * 8,
        out_specs=pl.BlockSpec(memory_space=pltpu.MemorySpace.VMEM),
    )(xp, p, m1, m2, tile(g1), tile(b1), tile(g2), tile(b2))

    out = out.reshape(N, H, W, C)
    return jnp.transpose(out, (0, 3, 1, 2))                          # NCHW


# ------------------------------- reference ---------------------------------

def reference(x, w1, w2, g1, b1, g2, b2):
    """Pure-JAX reference mirroring the PyTorch forward (training-mode BN)."""
    def bn(y, g, b):
        mean = jnp.mean(y, axis=(0, 2, 3), keepdims=True)
        var = jnp.mean((y - mean) ** 2, axis=(0, 2, 3), keepdims=True)
        return ((y - mean) * jax.lax.rsqrt(var + EPS)
                * g.reshape(1, -1, 1, 1) + b.reshape(1, -1, 1, 1))

    y = jax.nn.relu(bn(x, g1, b1))
    y = jax.lax.conv_general_dilated(y, w1, (1, 1), 'SAME',
                                     dimension_numbers=('NCHW', 'OIHW', 'NCHW'))
    y = jax.nn.relu(bn(y, g2, b2))
    y = jax.lax.conv_general_dilated(y, w2, (1, 1), 'SAME',
                                     dimension_numbers=('NCHW', 'OIHW', 'NCHW'))
    return y + x


if __name__ == "__main__":
    key = jax.random.PRNGKey(0)
    kx, kw1, kw2, kg1, kb1, kg2, kb2 = jax.random.split(key, 7)

    x = jax.random.normal(kx, (N, C, H, W), jnp.float32)
    w1 = 0.1 * jax.random.normal(kw1, (C, C, 3, 3), jnp.float32)   # OIHW
    w2 = 0.1 * jax.random.normal(kw2, (C, C, 3, 3), jnp.float32)
    g1 = 1.0 + 0.1 * jax.random.normal(kg1, (C,), jnp.float32)
    b1 = 0.1 * jax.random.normal(kb1, (C,), jnp.float32)
    g2 = 1.0 + 0.1 * jax.random.normal(kg2, (C,), jnp.float32)
    b2 = 0.1 * jax.random.normal(kb2, (C,), jnp.float32)

    out = preact_residual_block(x, w1, w2, g1, b1, g2, b2)
    out = jax.block_until_ready(out)

    ref = reference(x, w1, w2, g1, b1, g2, b2)
    assert out.shape == (N, C, H, W)
    max_err = float(jnp.max(jnp.abs(out - ref)))
    assert jnp.allclose(out, ref, atol=2e-3, rtol=2e-3), max_err

    print("KERNEL_OK")
</pallas_src>

<mosaic_0001>
module attributes {stable_mosaic.version = 11 : i64} {
  func.func @preact_block_kernel(%arg0: memref<32x128xf32, #tpu.memory_space<vmem>>, %arg1: memref<2x32x32xf32, #tpu.memory_space<vmem>>, %arg2: memref<384x128xf32, #tpu.memory_space<vmem>>, %arg3: memref<384x128xf32, #tpu.memory_space<vmem>>, %arg4: memref<1x128xf32, #tpu.memory_space<vmem>>, %arg5: memref<1x128xf32, #tpu.memory_space<vmem>>, %arg6: memref<1x128xf32, #tpu.memory_space<vmem>>, %arg7: memref<1x128xf32, #tpu.memory_space<vmem>>, %arg8: memref<32x128xf32, #tpu.memory_space<vmem>>) attributes {dimension_semantics = [], scalar_prefetch = 0 : i64, scratch_operands = 0 : i64, tpu.core_type = #tpu.core_type<tc>} {
    %c0 = arith.constant 0 : index
    %c0_0 = arith.constant 0 : index
    %0 = vector.load %arg0[%c0, %c0_0] : memref<32x128xf32, #tpu.memory_space<vmem>>, vector<32x128xf32>
    %c8_i32 = arith.constant 8 : i32
    %1 = tpu.dynamic_rotate %0 by %c8_i32 dim 1 : vector<32x128xf32>, i32 -> vector<32x128xf32>
    %2 = arith.addf %0, %1 : vector<32x128xf32>
    %c16_i32 = arith.constant 16 : i32
    %3 = tpu.dynamic_rotate %2 by %c16_i32 dim 1 : vector<32x128xf32>, i32 -> vector<32x128xf32>
    %4 = arith.addf %2, %3 : vector<32x128xf32>
    %c32_i32 = arith.constant 32 : i32
    %5 = tpu.dynamic_rotate %4 by %c32_i32 dim 1 : vector<32x128xf32>, i32 -> vector<32x128xf32>
    %6 = arith.addf %4, %5 : vector<32x128xf32>
    %c64_i32 = arith.constant 64 : i32
    %7 = tpu.dynamic_rotate %6 by %c64_i32 dim 1 : vector<32x128xf32>, i32 -> vector<32x128xf32>
    %8 = arith.addf %6, %7 : vector<32x128xf32>
    %cst = arith.constant dense<0.000000e+00> : vector<128xf32>
    %9 = vector.multi_reduction <add>, %8, %cst [0] : vector<32x128xf32> to vector<128xf32>
    %10 = vector.shape_cast %9 : vector<128xf32> to vector<1x128xf32>
    %cst_1 = arith.constant 0.001953125 : f32
    %11 = vector.broadcast %cst_1 : f32 to vector<1x128xf32>
    %12 = arith.mulf %10, %11 : vector<1x128xf32>
    %13 = vector.broadcast %12 : vector<1x128xf32> to vector<32x128xf32>
    %14 = arith.subf %0, %13 : vector<32x128xf32>
    %15 = arith.mulf %14, %14 : vector<32x128xf32>
    %c8_i32_2 = arith.constant 8 : i32
    %16 = tpu.dynamic_rotate %15 by %c8_i32_2 dim 1 : vector<32x128xf32>, i32 -> vector<32x128xf32>
    %17 = arith.addf %15, %16 : vector<32x128xf32>
    %c16_i32_3 = arith.constant 16 : i32
    %18 = tpu.dynamic_rotate %17 by %c16_i32_3 dim 1 : vector<32x128xf32>, i32 -> vector<32x128xf32>
    %19 = arith.addf %17, %18 : vector<32x128xf32>
    %c32_i32_4 = arith.constant 32 : i32
    %20 = tpu.dynamic_rotate %19 by %c32_i32_4 dim 1 : vector<32x128xf32>, i32 -> vector<32x128xf32>
    %21 = arith.addf %19, %20 : vector<32x128xf32>
    %c64_i32_5 = arith.constant 64 : i32
    %22 = tpu.dynamic_rotate %21 by %c64_i32_5 dim 1 : vector<32x128xf32>, i32 -> vector<32x128xf32>
    %23 = arith.addf %21, %22 : vector<32x128xf32>
    %cst_6 = arith.constant dense<0.000000e+00> : vector<128xf32>
    %24 = vector.multi_reduction <add>, %23, %cst_6 [0] : vector<32x128xf32> to vector<128xf32>
    %25 = vector.shape_cast %24 : vector<128xf32> to vector<1x128xf32>
    %cst_7 = arith.constant 0.001953125 : f32
    %26 = vector.broadcast %cst_7 : f32 to vector<1x128xf32>
    %27 = arith.mulf %25, %26 : vector<1x128xf32>
    %c0_8 = arith.constant 0 : index
    %c0_9 = arith.constant 0 : index
    %28 = vector.load %arg4[%c0_8, %c0_9] : memref<1x128xf32, #tpu.memory_space<vmem>>, vector<1x128xf32>
    %cst_10 = arith.constant 9.99999974E-6 : f32
    %29 = vector.broadcast %cst_10 : f32 to vector<1x128xf32>
    %30 = arith.addf %27, %29 : vector<1x128xf32>
    %31 = math.rsqrt %30 : vector<1x128xf32>
    %32 = arith.mulf %28, %31 : vector<1x128xf32>
    %33 = vector.broadcast %32 : vector<1x128xf32> to vector<32x128xf32>
    %34 = arith.mulf %14, %33 : vector<32x128xf32>
    %c0_11 = arith.constant 0 : index
    %c0_12 = arith.constant 0 : index
    %35 = vector.load %arg5[%c0_11, %c0_12] : memref<1x128xf32, #tpu.memory_space<vmem>>, vector<1x128xf32>
    %36 = vector.broadcast %35 : vector<1x128xf32> to vector<32x128xf32>
    %37 = arith.addf %34, %36 : vector<32x128xf32>
    %cst_13 = arith.constant 0.000000e+00 : f32
    %38 = vector.broadcast %cst_13 : f32 to vector<32x128xf32>
    %39 = arith.maximumf %37, %38 : vector<32x128xf32>
    %c0_14 = arith.constant 0 : index
    %c0_15 = arith.constant 0 : index
    %c0_16 = arith.constant 0 : index
    %40 = vector.load %arg1[%c0_14, %c0_15, %c0_16] : memref<2x32x32xf32, #tpu.memory_space<vmem>>, vector<1x32x32xf32>
    %41 = vector.shape_cast %40 : vector<1x32x32xf32> to vector<32x32xf32>
    %cst_17 = arith.constant dense<0.000000e+00> : vector<32x128xf32>
    %42 = tpu.matmul %41, %39, %cst_17 {dimension_numbers = #tpu.dot_dimension_numbers<[1], [0], [0], [1], [0, 0, 1, 1], [], []>} : vector<32x32xf32>, vector<32x128xf32>, vector<32x128xf32> -> vector<32x128xf32>
    %c1 = arith.constant 1 : index
    %c0_18 = arith.constant 0 : index
    %c0_19 = arith.constant 0 : index
    %43 = vector.load %arg1[%c1, %c0_18, %c0_19] : memref<2x32x32xf32, #tpu.memory_space<vmem>>, vector<1x32x32xf32>
    %44 = vector.shape_cast %43 : vector<1x32x32xf32> to vector<32x32xf32>
    %cst_20 = arith.constant dense<0.000000e+00> : vector<32x128xf32>
    %45 = tpu.matmul %44, %39, %cst_20 {dimension_numbers = #tpu.dot_dimension_numbers<[1], [0], [0], [1], [0, 0, 1, 1], [], []>} : vector<32x32xf32>, vector<32x128xf32>, vector<32x128xf32> -> vector<32x128xf32>
    %46 = tpu.concatenate %42, %39, %45 in 1 : vector<32x128xf32>, vector<32x128xf32>, vector<32x128xf32> -> vector<32x384xf32>
    %c0_21 = arith.constant 0 : index
    %c0_22 = arith.constant 0 : index
    %47 = vector.load %arg2[%c0_21, %c0_22] : memref<384x128xf32, #tpu.memory_space<vmem>>, vector<384x128xf32>
    %cst_23 = arith.constant dense<0.000000e+00> : vector<32x128xf32>
    %48 = tpu.matmul %46, %47, %cst_23 {dimension_numbers = #tpu.dot_dimension_numbers<[1], [0], [0], [1], [0, 0, 1, 1], [], []>} : vector<32x384xf32>, vector<384x128xf32>, vector<32x128xf32> -> vector<32x128xf32>
    %c8_i32_24 = arith.constant 8 : i32
    %49 = tpu.dynamic_rotate %48 by %c8_i32_24 dim 1 : vector<32x128xf32>, i32 -> vector<32x128xf32>
    %50 = arith.addf %48, %49 : vector<32x128xf32>
    %c16_i32_25 = arith.constant 16 : i32
    %51 = tpu.dynamic_rotate %50 by %c16_i32_25 dim 1 : vector<32x128xf32>, i32 -> vector<32x128xf32>
    %52 = arith.addf %50, %51 : vector<32x128xf32>
    %c32_i32_26 = arith.constant 32 : i32
    %53 = tpu.dynamic_rotate %52 by %c32_i32_26 dim 1 : vector<32x128xf32>, i32 -> vector<32x128xf32>
    %54 = arith.addf %52, %53 : vector<32x128xf32>
    %c64_i32_27 = arith.constant 64 : i32
    %55 = tpu.dynamic_rotate %54 by %c64_i32_27 dim 1 : vector<32x128xf32>, i32 -> vector<32x128xf32>
    %56 = arith.addf %54, %55 : vector<32x128xf32>
    %cst_28 = arith.constant dense<0.000000e+00> : vector<128xf32>
    %57 = vector.multi_reduction <add>, %56, %cst_28 [0] : vector<32x128xf32> to vector<128xf32>
    %58 = vector.shape_cast %57 : vector<128xf32> to vector<1x128xf32>
    %cst_29 = arith.constant 0.001953125 : f32
    %59 = vector.broadcast %cst_29 : f32 to vector<1x128xf32>
    %60 = arith.mulf %58, %59 : vector<1x128xf32>
    %61 = vector.broadcast %60 : vector<1x128xf32> to vector<32x128xf32>
    %62 = arith.subf %48, %61 : vector<32x128xf32>
    %63 = arith.mulf %62, %62 : vector<32x128xf32>
    %c8_i32_30 = arith.constant 8 : i32
    %64 = tpu.dynamic_rotate %63 by %c8_i32_30 dim 1 : vector<32x128xf32>, i32 -> vector<32x128xf32>
    %65 = arith.addf %63, %64 : vector<32x128xf32>
    %c16_i32_31 = arith.constant 16 : i32
    %66 = tpu.dynamic_rotate %65 by %c16_i32_31 dim 1 : vector<32x128xf32>, i32 -> vector<32x128xf32>
    %67 = arith.addf %65, %66 : vector<32x128xf32>
    %c32_i32_32 = arith.constant 32 : i32
    %68 = tpu.dynamic_rotate %67 by %c32_i32_32 dim 1 : vector<32x128xf32>, i32 -> vector<32x128xf32>
    %69 = arith.addf %67, %68 : vector<32x128xf32>
    %c64_i32_33 = arith.constant 64 : i32
    %70 = tpu.dynamic_rotate %69 by %c64_i32_33 dim 1 : vector<32x128xf32>, i32 -> vector<32x128xf32>
    %71 = arith.addf %69, %70 : vector<32x128xf32>
    %cst_34 = arith.constant dense<0.000000e+00> : vector<128xf32>
    %72 = vector.multi_reduction <add>, %71, %cst_34 [0] : vector<32x128xf32> to vector<128xf32>
    %73 = vector.shape_cast %72 : vector<128xf32> to vector<1x128xf32>
    %cst_35 = arith.constant 0.001953125 : f32
    %74 = vector.broadcast %cst_35 : f32 to vector<1x128xf32>
    %75 = arith.mulf %73, %74 : vector<1x128xf32>
    %c0_36 = arith.constant 0 : index
    %c0_37 = arith.constant 0 : index
    %76 = vector.load %arg6[%c0_36, %c0_37] : memref<1x128xf32, #tpu.memory_space<vmem>>, vector<1x128xf32>
    %cst_38 = arith.constant 9.99999974E-6 : f32
    %77 = vector.broadcast %cst_38 : f32 to vector<1x128xf32>
    %78 = arith.addf %75, %77 : vector<1x128xf32>
    %79 = math.rsqrt %78 : vector<1x128xf32>
    %80 = arith.mulf %76, %79 : vector<1x128xf32>
    %81 = vector.broadcast %80 : vector<1x128xf32> to vector<32x128xf32>
    %82 = arith.mulf %62, %81 : vector<32x128xf32>
    %c0_39 = arith.constant 0 : index
    %c0_40 = arith.constant 0 : index
    %83 = vector.load %arg7[%c0_39, %c0_40] : memref<1x128xf32, #tpu.memory_space<vmem>>, vector<1x128xf32>
    %84 = vector.broadcast %83 : vector<1x128xf32> to vector<32x128xf32>
    %85 = arith.addf %82, %84 : vector<32x128xf32>
    %cst_41 = arith.constant 0.000000e+00 : f32
    %86 = vector.broadcast %cst_41 : f32 to vector<32x128xf32>
    %87 = arith.maximumf %85, %86 : vector<32x128xf32>
    %c0_42 = arith.constant 0 : index
    %c0_43 = arith.constant 0 : index
    %c0_44 = arith.constant 0 : index
    %88 = vector.load %arg1[%c0_42, %c0_43, %c0_44] : memref<2x32x32xf32, #tpu.memory_space<vmem>>, vector<1x32x32xf32>
    %89 = vector.shape_cast %88 : vector<1x32x32xf32> to vector<32x32xf32>
    %cst_45 = arith.constant dense<0.000000e+00> : vector<32x128xf32>
    %90 = tpu.matmul %89, %87, %cst_45 {dimension_numbers = #tpu.dot_dimension_numbers<[1], [0], [0], [1], [0, 0, 1, 1], [], []>} : vector<32x32xf32>, vector<32x128xf32>, vector<32x128xf32> -> vector<32x128xf32>
    %c1_46 = arith.constant 1 : index
    %c0_47 = arith.constant 0 : index
    %c0_48 = arith.constant 0 : index
    %91 = vector.load %arg1[%c1_46, %c0_47, %c0_48] : memref<2x32x32xf32, #tpu.memory_space<vmem>>, vector<1x32x32xf32>
    %92 = vector.shape_cast %91 : vector<1x32x32xf32> to vector<32x32xf32>
    %cst_49 = arith.constant dense<0.000000e+00> : vector<32x128xf32>
    %93 = tpu.matmul %92, %87, %cst_49 {dimension_numbers = #tpu.dot_dimension_numbers<[1], [0], [0], [1], [0, 0, 1, 1], [], []>} : vector<32x32xf32>, vector<32x128xf32>, vector<32x128xf32> -> vector<32x128xf32>
    %94 = tpu.concatenate %90, %87, %93 in 1 : vector<32x128xf32>, vector<32x128xf32>, vector<32x128xf32> -> vector<32x384xf32>
    %c0_50 = arith.constant 0 : index
    %c0_51 = arith.constant 0 : index
    %95 = vector.load %arg3[%c0_50, %c0_51] : memref<384x128xf32, #tpu.memory_space<vmem>>, vector<384x128xf32>
    %cst_52 = arith.constant dense<0.000000e+00> : vector<32x128xf32>
    %96 = tpu.matmul %94, %95, %cst_52 {dimension_numbers = #tpu.dot_dimension_numbers<[1], [0], [0], [1], [0, 0, 1, 1], [], []>} : vector<32x384xf32>, vector<384x128xf32>, vector<32x128xf32> -> vector<32x128xf32>
    %97 = arith.addf %96, %0 : vector<32x128xf32>
    %c0_53 = arith.constant 0 : index
    %c0_54 = arith.constant 0 : index
    %98 = vector.load %arg8[%c0_53, %c0_54] : memref<32x128xf32, #tpu.memory_space<vmem>>, vector<32x128xf32>
    tpu.vector_store %arg8[%c0_53, %c0_54], %97 {strides = array<i32>} : memref<32x128xf32, #tpu.memory_space<vmem>>, vector<32x128xf32>,
    return
  }
}

</mosaic_0001>

<llo_original>
// kernel: tpu_custom_call.1
$region0: #{tpu_custom_call.1}
  #allocation0 [shape = 'u32[]', space=smem, size = 0x4, offset = 0x4, fixed_abs, tag = 'smem constant byte address 0x4 - core index']
  #allocation1 [shape = 'u32[72,128]{1,0:T(1,128)}', space=vmem, size = 0x9000, scoped, tag = 'internal scratch']
  %s0 = inlined_call_operand.hbm [shape: f32[32,128], index: 0, kind: input, shape index: {}]
  %s1 = inlined_call_operand.hbm [shape: f32[2,32,32], index: 1, kind: input, shape index: {}]
  %s2 = inlined_call_operand.hbm [shape: f32[384,128], index: 2, kind: input, shape index: {}]
  %s3 = inlined_call_operand.hbm [shape: f32[384,128], index: 3, kind: input, shape index: {}]
  %s4 = inlined_call_operand.vmem [shape: f32[1,128], index: 4, kind: input, shape index: {}]
  %s5 = inlined_call_operand.vmem [shape: f32[1,128], index: 5, kind: input, shape index: {}]
  %s6 = inlined_call_operand.vmem [shape: f32[1,128], index: 6, kind: input, shape index: {}]
  %s7 = inlined_call_operand.vmem [shape: f32[1,128], index: 7, kind: input, shape index: {}]
  %s8 = inlined_call_operand.hbm [shape: f32[32,128], index: 8, kind: output, shape index: {}]
  %s9 = sld [smem:[#allocation0]]
  $region58: #{tpu_custom_call.1} parent=0
    _
  %s11 = ssub.s32 1, %s9
  %s12 = scalar_select 0, %s11, %s9
  $region1: #{tpu_custom_call.1} parent=0
    #allocation2 [shape = 'u8[16384]{0}', space=vmem, size = 0x4000, scoped, tag = 'input window, operand 0, single buffered']
    #allocation3 [shape = 's32[1]{0}', space=sflag, size = 0x4, scoped, tag = 'scoped memory for tpu_custom_call.1']
    #allocation4 [shape = 's32[1]{0}', space=sflag, size = 0x4, scoped, tag = 'scoped memory for tpu_custom_call.1']
    #allocation5 [shape = 'u8[32768]{0}', space=vmem, size = 0x8000, scoped, tag = 'input window, operand 1, single buffered']
    #allocation6 [shape = 's32[1]{0}', space=sflag, size = 0x4, scoped, tag = 'scoped memory for tpu_custom_call.1']
    #allocation7 [shape = 'u8[196608]{0}', space=vmem, size = 0x30000, scoped, tag = 'input window, operand 2, single buffered']
    #allocation8 [shape = 'u8[196608]{0}', space=vmem, size = 0x30000, scoped, tag = 'input window, operand 3, single buffered']
    #allocation9 [shape = 's32[1]{0}', space=sflag, size = 0x4, scoped, tag = 'scoped memory for tpu_custom_call.1']
    #allocation10 [shape = 'u8[16384]{0}', space=vmem, size = 0x4000, scoped, tag = 'output window, operand 0, single buffered']
    %13 = vsyncpa [#allocation3], 0
    %14 = vsyncpa [#allocation6], 0
    %15 = vsyncpa [#allocation9], 0
    %16 = vsyncpa [#allocation4], 0
    // Predicated region
    $region2: #{tpu_custom_call.1} parent=1 // pred_check
      _
    $region3: #{tpu_custom_call.1} parent=1 // pred_check_branch
      %18 = sbr.rel (0) target = $region5
    $region4: #{tpu_custom_call.1} parent=1 // pred_region
      %20 = vsyncadd [#allocation3], 0
      %s21 = sshll.u32 %s0, 4
      %s22 = int_to_ptr.hbm [resolvable:$true] %s21
      %s23 = sshll.u32 [#allocation2], 4
      %s24 = int_to_ptr.vmem [resolvable:$true] %s23
      %29 = dma.hbm_to_vmem [thread:$0]  %s22, 512, %s24, [#allocation3], 128, 128, 8
    $region5: #{tpu_custom_call.1} parent=1 // pred_fallthru
      _
    // Predicated region
    $region6: #{tpu_custom_call.1} parent=1 // pred_check
      _
    $region7: #{tpu_custom_call.1} parent=1 // pred_check_branch
      %31 = sbr.rel (0) target = $region9
    $region8: #{tpu_custom_call.1} parent=1 // pred_region
      %33 = vsyncadd [#allocation6], 0
      %s34 = sshll.u32 %s1, 4
      %s35 = int_to_ptr.hbm [resolvable:$true] %s34
      %s36 = sshll.u32 [#allocation5], 4
      %s37 = int_to_ptr.vmem [resolvable:$true] %s36
      %42 = dma.hbm_to_vmem [thread:$0]  %s35, 1024, %s37, [#allocation6], 128, 128, 8
    $region9: #{tpu_custom_call.1} parent=1 // pred_fallthru
      _
    // Predicated region
    $region10: #{tpu_custom_call.1} parent=1 // pred_check
      _
    $region11: #{tpu_custom_call.1} parent=1 // pred_check_branch
      %44 = sbr.rel (0) target = $region13
    $region12: #{tpu_custom_call.1} parent=1 // pred_region
      %46 = vsyncadd [#allocation6], 0
      %s47 = sshll.u32 %s2, 4
      %s48 = int_to_ptr.hbm [resolvable:$true] %s47
      %s49 = sshll.u32 [#allocation7], 4
      %s50 = int_to_ptr.vmem [resolvable:$true] %s49
      %55 = dma.hbm_to_vmem [thread:$0]  %s48, 6144, %s50, [#allocation6], 128, 128, 8
    $region13: #{tpu_custom_call.1} parent=1 // pred_fallthru
      _
    // Predicated region
    $region14: #{tpu_custom_call.1} parent=1 // pred_check
      _
    $region15: #{tpu_custom_call.1} parent=1 // pred_check_branch
      %57 = sbr.rel (0) target = $region17
    $region16: #{tpu_custom_call.1} parent=1 // pred_region
      %59 = vsyncadd [#allocation9], 0
      %s60 = sshll.u32 %s3, 4
      %s61 = int_to_ptr.hbm [resolvable:$true] %s60
      %s62 = sshll.u32 [#allocation8], 4
      %s63 = int_to_ptr.vmem [resolvable:$true] %s62
      %68 = dma.hbm_to_vmem [thread:$0]  %s61, 6144, %s63, [#allocation9], 128, 128, 8
    $region17: #{tpu_custom_call.1} parent=1 // pred_fallthru
      _
    // Predicated region
    $region18: #{tpu_custom_call.1} parent=1 // pred_check
      _
    $region19: #{tpu_custom_call.1} parent=1 // pred_check_branch
      %70 = sbr.rel (0) target = $region21
    $region20: #{tpu_custom_call.1} parent=1 // pred_region
      _
    $region21: #{tpu_custom_call.1} parent=1 // pred_fallthru
      _
    // Predicated region
    $region22: #{tpu_custom_call.1} parent=1 // pred_check
      _
    $region23: #{tpu_custom_call.1} parent=1 // pred_check_branch
      %72 = sbr.rel (0) target = $region25
    $region24: #{tpu_custom_call.1} parent=1 // pred_region
      _
    $region25: #{tpu_custom_call.1} parent=1 // pred_fallthru
      _
    // Predicated region
    $region26: #{tpu_custom_call.1} parent=1 // pred_check
      _
    $region27: #{tpu_custom_call.1} parent=1 // pred_check_branch
      %74 = sbr.rel (0) target = $region29
    $region28: #{tpu_custom_call.1} parent=1 // pred_region
      _
    $region29: #{tpu_custom_call.1} parent=1 // pred_fallthru
      _
    // Predicated region
    $region30: #{tpu_custom_call.1} parent=1 // pred_check
      _
    $region31: #{tpu_custom_call.1} parent=1 // pred_check_branch
      %76 = sbr.rel (0) target = $region33
    $region32: #{tpu_custom_call.1} parent=1 // pred_region
      _
    $region33: #{tpu_custom_call.1} parent=1 // pred_fallthru
      _
    // Predicated region
    $region34: #{tpu_custom_call.1} parent=1 // pred_check
      _
    $region35: #{tpu_custom_call.1} parent=1 // pred_check_branch
      %78 = sbr.rel (0) target = $region37
    $region36: #{tpu_custom_call.1} parent=1 // pred_region
      %80 = dma.done [#allocation3], 512
    $region37: #{tpu_custom_call.1} parent=1 // pred_fallthru
      _
    // Predicated region
    $region38: #{tpu_custom_call.1} parent=1 // pred_check
      _
    $region39: #{tpu_custom_call.1} parent=1 // pred_check_branch
      %82 = sbr.rel (0) target = $region41
    $region40: #{tpu_custom_call.1} parent=1 // pred_region
      %84 = dma.done [#allocation6], 1024
    $region41: #{tpu_custom_call.1} parent=1 // pred_fallthru
      _
    // Predicated region
    $region42: #{tpu_custom_call.1} parent=1 // pred_check
      _
    $region43: #{tpu_custom_call.1} parent=1 // pred_check_branch
      %86 = sbr.rel (0) target = $region45
    $region44: #{tpu_custom_call.1} parent=1 // pred_region
      %88 = dma.done [#allocation6], 6144
    $region45: #{tpu_custom_call.1} parent=1 // pred_fallthru
      _
    // Predicated region
    $region46: #{tpu_custom_call.1} parent=1 // pred_check
      _
    $region47: #{tpu_custom_call.1} parent=1 // pred_check_branch
      %90 = sbr.rel (0) target = $region49
    $region48: #{tpu_custom_call.1} parent=1 // pred_region
      %92 = dma.done [#allocation9], 6144
    $region49: #{tpu_custom_call.1} parent=1 // pred_fallthru
      _
    %v93 = vld [vmem:[#allocation2] sm:$0xff]
    %v94 = vld [vmem:[#allocation2 + $0x8] sm:$0xff]
    %v95 = vld [vmem:[#allocation2 + $0x10] sm:$0xff]
    %v96 = vld [vmem:[#allocation2 + $0x18] sm:$0xff]
    %97 = vrot.lane.b32.xlu0 %v93, 8
    %v98 = vpop.permute.xlu0 %97
    %99 = vrot.lane.b32.xlu0 %v94, 8
    %v100 = vpop.permute.xlu0 %99
    %101 = vrot.lane.b32.xlu0 %v95, 8
    %v102 = vpop.permute.xlu0 %101
    %103 = vrot.lane.b32.xlu0 %v96, 8
    %v104 = vpop.permute.xlu0 %103
    %v105 = vadd.f32 %v93, %v98
    %v106 = vadd.f32 %v94, %v100
    %v107 = vadd.f32 %v95, %v102
    %v108 = vadd.f32 %v96, %v104
    %109 = vrot.lane.b32.xlu0 %v105, 16
    %v110 = vpop.permute.xlu0 %109
    %111 = vrot.lane.b32.xlu0 %v106, 16
    %v112 = vpop.permute.xlu0 %111
    %113 = vrot.lane.b32.xlu0 %v107, 16
    %v114 = vpop.permute.xlu0 %113
    %115 = vrot.lane.b32.xlu0 %v108, 16
    %v116 = vpop.permute.xlu0 %115
    %v117 = vadd.f32 %v105, %v110
    %v118 = vadd.f32 %v106, %v112
    %v119 = vadd.f32 %v107, %v114
    %v120 = vadd.f32 %v108, %v116
    %121 = vrot.lane.b32.xlu0 %v117, 32
    %v122 = vpop.permute.xlu0 %121
    %123 = vrot.lane.b32.xlu0 %v118, 32
    %v124 = vpop.permute.xlu0 %123
    %125 = vrot.lane.b32.xlu0 %v119, 32
    %v126 = vpop.permute.xlu0 %125
    %127 = vrot.lane.b32.xlu0 %v120, 32
    %v128 = vpop.permute.xlu0 %127
    %v129 = vadd.f32 %v117, %v122
    %v130 = vadd.f32 %v118, %v124
    %v131 = vadd.f32 %v119, %v126
    %v132 = vadd.f32 %v120, %v128
    %133 = vrot.lane.b32.xlu0 %v129, 64
    %v134 = vpop.permute.xlu0 %133
    %135 = vrot.lane.b32.xlu0 %v130, 64
    %v136 = vpop.permute.xlu0 %135
    %137 = vrot.lane.b32.xlu0 %v131, 64
    %v138 = vpop.permute.xlu0 %137
    %139 = vrot.lane.b32.xlu0 %v132, 64
    %v140 = vpop.permute.xlu0 %139
    %v141 = vadd.f32 %v129, %v134
    %v142 = vadd.f32 %v130, %v136
    %v143 = vadd.f32 %v131, %v138
    %v144 = vadd.f32 %v132, %v140
    %v145 = vadd.f32 %v141, %v142
    %v146 = vadd.f32 %v145, %v143
    %v147 = vadd.f32 %v146, %v144
    %v148 = vrot.slane %v147, 4
    %v149 = vadd.f32 %v147, %v148
    %v150 = vrot.slane %v149, 2
    %v151 = vadd.f32 %v149, %v150
    %v152 = vrot.slane %v151, 1
    %v153 = vadd.f32 %v151, %v152
    %v154 = vmul.f32 %v153, 0.001953125
    %v155 = vsub.f32 %v93, %v154
    %v156 = vsub.f32 %v94, %v154
    %v157 = vsub.f32 %v95, %v154
    %v158 = vsub.f32 %v96, %v154
    %v159 = vmul.f32 %v155, %v155
    %v160 = vmul.f32 %v156, %v156
    %v161 = vmul.f32 %v157, %v157
    %v162 = vmul.f32 %v158, %v158
    %163 = vrot.lane.b32.xlu0 %v159, 8
    %v164 = vpop.permute.xlu0 %163
    %165 = vrot.lane.b32.xlu0 %v160, 8
    %v166 = vpop.permute.xlu0 %165
    %167 = vrot.lane.b32.xlu0 %v161, 8
    %v168 = vpop.permute.xlu0 %167
    %169 = vrot.lane.b32.xlu0 %v162, 8
    %v170 = vpop.permute.xlu0 %169
    %v171 = vadd.f32 %v159, %v164
    %v172 = vadd.f32 %v160, %v166
    %v173 = vadd.f32 %v161, %v168
    %v174 = vadd.f32 %v162, %v170
    %175 = vrot.lane.b32.xlu0 %v171, 16
    %v176 = vpop.permute.xlu0 %175
    %177 = vrot.lane.b32.xlu0 %v172, 16
    %v178 = vpop.permute.xlu0 %177
    %179 = vrot.lane.b32.xlu0 %v173, 16
    %v180 = vpop.permute.xlu0 %179
    %181 = vrot.lane.b32.xlu0 %v174, 16
    %v182 = vpop.permute.xlu0 %181
    %v183 = vadd.f32 %v171, %v176
    %v184 = vadd.f32 %v172, %v178
    %v185 = vadd.f32 %v173, %v180
    %v186 = vadd.f32 %v174, %v182
    %187 = vrot.lane.b32.xlu0 %v183, 32
    %v188 = vpop.permute.xlu0 %187
    %189 = vrot.lane.b32.xlu0 %v184, 32
    %v190 = vpop.permute.xlu0 %189
    %191 = vrot.lane.b32.xlu0 %v185, 32
    %v192 = vpop.permute.xlu0 %191
    %193 = vrot.lane.b32.xlu0 %v186, 32
    %v194 = vpop.permute.xlu0 %193
    %v195 = vadd.f32 %v183, %v188
    %v196 = vadd.f32 %v184, %v190
    %v197 = vadd.f32 %v185, %v192
    %v198 = vadd.f32 %v186, %v194
    %199 = vrot.lane.b32.xlu0 %v195, 64
    %v200 = vpop.permute.xlu0 %199
    %201 = vrot.lane.b32.xlu0 %v196, 64
    %v202 = vpop.permute.xlu0 %201
    %203 = vrot.lane.b32.xlu0 %v197, 64
    %v204 = vpop.permute.xlu0 %203
    %205 = vrot.lane.b32.xlu0 %v198, 64
    %v206 = vpop.permute.xlu0 %205
    %v207 = vadd.f32 %v195, %v200
    %v208 = vadd.f32 %v196, %v202
    %v209 = vadd.f32 %v197, %v204
    %v210 = vadd.f32 %v198, %v206
    %v211 = vadd.f32 %v207, %v208
    %v212 = vadd.f32 %v211, %v209
    %v213 = vadd.f32 %v212, %v210
    %v214 = vrot.slane %v213, 4
    %v215 = vadd.f32 %v213, %v214
    %v216 = vrot.slane %v215, 2
    %v217 = vadd.f32 %v215, %v216
    %v218 = vrot.slane %v217, 1
    %v219 = vadd.f32 %v217, %v218
    %v220 = vmul.f32 %v219, 0.001953125
    %v221 = vld [vmem:[%s4] sm:$0x1]
    %v222 = vadd.f32 %v220, 1e-05
    %v223 = vrsqrt.pop %v222
    %v224 = vmul.f32 %v223, %v222
    %v225 = vmul.f32 %v224, %v223
    %v226 = vmul.f32 0.5, %v225
    %v227 = vsub.f32 1.5, %v226
    %v228 = vmul.f32 %v223, %v227
    %vm229 = vweird.f32 %v222
    %vm230 = vweird.f32 %v223
    %vm231 = vmor %vm229, %vm230
    %v232 = vsel %vm231, %v223, %v228
    %v233 = vmul.f32 %v221, %v232
    %v235 = vperm.slane %v233, 0
    %v237 = vmul.f32 %v155, %v235
    %v238 = vmul.f32 %v156, %v235
    %v239 = vmul.f32 %v157, %v235
    %v240 = vmul.f32 %v158, %v235
    %v241 = vld [vmem:[%s5] sm:$0x1]
    %v243 = vperm.slane %v241, 0
    %v245 = vadd.f32 %v237, %v243
    %v246 = vadd.f32 %v238, %v243
    %v247 = vadd.f32 %v239, %v243
    %v248 = vadd.f32 %v240, %v243
    %v249 = vmax.f32 %v245, 0.0
    %v250 = vmax.f32 %v246, 0.0
    %v251 = vmax.f32 %v247, 0.0
    %v252 = vmax.f32 %v248, 0.0
    %v253 = vld [vmem:[#allocation5] sm:$0xff]
    %v254 = vld [vmem:[#allocation5 + $0x8] sm:$0xff]
    %v255 = vld [vmem:[#allocation5 + $0x10] sm:$0xff]
    %v256 = vld [vmem:[#allocation5 + $0x18] sm:$0xff]
    %vm257 = vcmask 261120
    %v259 = vsel %vm257, %v253, 0
    %v262 = vsel %vm257, %v254, 0
    %v265 = vsel %vm257, %v255, 0
    %v268 = vsel %vm257, %v256, 0
    %270 = vmatpush.msra.mxu0 0.0
    %271 = vmatpush.msra.mxu0 0.0
    %272 = vmatpush.msra.mxu0 0.0
    %273 = vmatpush.msra.mxu0 0.0
    %274 = vmatpush.msra.mxu0 0.0
    %275 = vmatpush.msra.mxu0 0.0
    %276 = vmatpush.msra.mxu0 0.0
    %277 = vmatpush.msra.mxu0 0.0
    %278 = vmatpush.msra.mxu0 0.0
    %279 = vmatpush.msra.mxu0 0.0
    %280 = vmatpush.msra.mxu0 0.0
    %281 = vmatpush.msra.mxu0 0.0
    %282 = vmatpush.msra.mxu0 %v252
    %283 = vmatpush.msra.mxu0 %v251
    %284 = vmatpush.msra.mxu0 %v250
    %285 = vmatpush.msra.mxu0 %v249
    %286 = vmatmul.f32.gmra.mxu0 %v259
    %v287 = vpop.f32.mrf.mxu0
    %v288 = vadd.f32 0.0, %v287
    %289 = vmatmul.f32.gmra.mxu0 %v262
    %v290 = vpop.f32.mrf.mxu0
    %v291 = vadd.f32 0.0, %v290
    %292 = vmatmul.f32.gmra.mxu0 %v265
    %v293 = vpop.f32.mrf.mxu0
    %v294 = vadd.f32 0.0, %v293
    %295 = vmatmul.f32.gmra.mxu0 %v268
    %v296 = vpop.f32.mrf.mxu0
    %v297 = vadd.f32 0.0, %v296
    %298 = vdwg.mxu0
    %s299 = scalar_lea.vmem [#allocation5], 32
    %v300 = vld [vmem:[%s299] sm:$0xff]
    %v301 = vld [vmem:[%s299 + $0x8] sm:$0xff]
    %v302 = vld [vmem:[%s299 + $0x10] sm:$0xff]
    %v303 = vld [vmem:[%s299 + $0x18] sm:$0xff]
    %v305 = vsel %vm257, %v300, 0
    %v308 = vsel %vm257, %v301, 0
    %v311 = vsel %vm257, %v302, 0
    %v314 = vsel %vm257, %v303, 0
    %316 = vmatpush.msra.mxu0 0.0
    %317 = vmatpush.msra.mxu0 0.0
    %318 = vmatpush.msra.mxu0 0.0
    %319 = vmatpush.msra.mxu0 0.0
    %320 = vmatpush.msra.mxu0 0.0
    %321 = vmatpush.msra.mxu0 0.0
    %322 = vmatpush.msra.mxu0 0.0
    %323 = vmatpush.msra.mxu0 0.0
    %324 = vmatpush.msra.mxu0 0.0
    %325 = vmatpush.msra.mxu0 0.0
    %326 = vmatpush.msra.mxu0 0.0
    %327 = vmatpush.msra.mxu0 0.0
    %328 = vmatpush.msra.mxu0 %v252
    %329 = vmatpush.msra.mxu0 %v251
    %330 = vmatpush.msra.mxu0 %v250
    %331 = vmatpush.msra.mxu0 %v249
    %332 = vmatmul.f32.gmra.mxu0 %v305
    %v333 = vpop.f32.mrf.mxu0
    %v334 = vadd.f32 0.0, %v333
    %335 = vmatmul.f32.gmra.mxu0 %v308
    %v336 = vpop.f32.mrf.mxu0
    %v337 = vadd.f32 0.0, %v336
    %338 = vmatmul.f32.gmra.mxu0 %v311
    %v339 = vpop.f32.mrf.mxu0
    %v340 = vadd.f32 0.0, %v339
    %341 = vmatmul.f32.gmra.mxu0 %v314
    %v342 = vpop.f32.mrf.mxu0
    %v343 = vadd.f32 0.0, %v342
    %344 = vdwg.mxu0
    %v345 = vld [vmem:[#allocation7] sm:$0xff]
    %v346 = vld [vmem:[#allocation7 + $0x8] sm:$0xff]
    %v347 = vld [vmem:[#allocation7 + $0x10] sm:$0xff]
    %v348 = vld [vmem:[#allocation7 + $0x18] sm:$0xff]
    %v349 = vld [vmem:[#allocation7 + $0x20] sm:$0xff]
    %v350 = vld [vmem:[#allocation7 + $0x28] sm:$0xff]
    %v351 = vld [vmem:[#allocation7 + $0x30] sm:$0xff]
    %v352 = vld [vmem:[#allocation7 + $0x38] sm:$0xff]
    %v353 = vld [vmem:[#allocation7 + $0x40] sm:$0xff]
    %v354 = vld [vmem:[#allocation7 + $0x48] sm:$0xff]
    %v355 = vld [vmem:[#allocation7 + $0x50] sm:$0xff]
    %v356 = vld [vmem:[#allocation7 + $0x58] sm:$0xff]
    %v357 = vld [vmem:[#allocation7 + $0x60] sm:$0xff]
    %v358 = vld [vmem:[#allocation7 + $0x68] sm:$0xff]
    %v359 = vld [vmem:[#allocation7 + $0x70] sm:$0xff]
    %v360 = vld [vmem:[#allocation7 + $0x78] sm:$0xff]
    %v361 = vld [vmem:[#allocation7 + $0x80] sm:$0xff]
    %v362 = vld [vmem:[#allocation7 + $0x88] sm:$0xff]
    %v363 = vld [vmem:[#allocation7 + $0x90] sm:$0xff]
    %v364 = vld [vmem:[#allocation7 + $0x98] sm:$0xff]
    %v365 = vld [vmem:[#allocation7 + $0xa0] sm:$0xff]
    %v366 = vld [vmem:[#allocation7 + $0xa8] sm:$0xff]
    %v367 = vld [vmem:[#allocation7 + $0xb0] sm:$0xff]
    %v368 = vld [vmem:[#allocation7 + $0xb8] sm:$0xff]
    %v369 = vld [vmem:[#allocation7 + $0xc0] sm:$0xff]
    %v370 = vld [vmem:[#allocation7 + $0xc8] sm:$0xff]
    %v371 = vld [vmem:[#allocation7 + $0xd0] sm:$0xff]
    %v372 = vld [vmem:[#allocation7 + $0xd8] sm:$0xff]
    %v373 = vld [vmem:[#allocation7 + $0xe0] sm:$0xff]
    %v374 = vld [vmem:[#allocation7 + $0xe8] sm:$0xff]
    %v375 = vld [vmem:[#allocation7 + $0xf0] sm:$0xff]
    %v376 = vld [vmem:[#allocation7 + $0xf8] sm:$0xff]
    %v377 = vld [vmem:[#allocation7 + $0x100] sm:$0xff]
    %v378 = vld [vmem:[#allocation7 + $0x108] sm:$0xff]
    %v379 = vld [vmem:[#allocation7 + $0x110] sm:$0xff]
    %v380 = vld [vmem:[#allocation7 + $0x118] sm:$0xff]
    %v381 = vld [vmem:[#allocation7 + $0x120] sm:$0xff]
    %v382 = vld [vmem:[#allocation7 + $0x128] sm:$0xff]
    %v383 = vld [vmem:[#allocation7 + $0x130] sm:$0xff]
    %v384 = vld [vmem:[#allocation7 + $0x138] sm:$0xff]
    %v385 = vld [vmem:[#allocation7 + $0x140] sm:$0xff]
    %v386 = vld [vmem:[#allocation7 + $0x148] sm:$0xff]
    %v387 = vld [vmem:[#allocation7 + $0x150] sm:$0xff]
    %v388 = vld [vmem:[#allocation7 + $0x158] sm:$0xff]
    %v389 = vld [vmem:[#allocation7 + $0x160] sm:$0xff]
    %v390 = vld [vmem:[#allocation7 + $0x168] sm:$0xff]
    %v391 = vld [vmem:[#allocation7 + $0x170] sm:$0xff]
    %v392 = vld [vmem:[#allocation7 + $0x178] sm:$0xff]
    %393 = vmatpush.msra.mxu0 %v360
    %394 = vmatpush.msra.mxu0 %v359
    %395 = vmatpush.msra.mxu0 %v358
    %396 = vmatpush.msra.mxu0 %v357
    %397 = vmatpush.msra.mxu0 %v356
    %398 = vmatpush.msra.mxu0 %v355
    %399 = vmatpush.msra.mxu0 %v354
    %400 = vmatpush.msra.mxu0 %v353
    %401 = vmatpush.msra.mxu0 %v352
    %402 = vmatpush.msra.mxu0 %v351
    %403 = vmatpush.msra.mxu0 %v350
    %404 = vmatpush.msra.mxu0 %v349
    %405 = vmatpush.msra.mxu0 %v348
    %406 = vmatpush.msra.mxu0 %v347
    %407 = vmatpush.msra.mxu0 %v346
    %408 = vmatpush.msra.mxu0 %v345
    %409 = vmatmul.f32.gmra.mxu0 %v288
    %v410 = vpop.f32.mrf.mxu0
    %v411 = vadd.f32 0.0, %v410
    %412 = vmatmul.f32.gmra.mxu0 %v291
    %v413 = vpop.f32.mrf.mxu0
    %v414 = vadd.f32 0.0, %v413
    %415 = vmatmul.f32.gmra.mxu0 %v294
    %v416 = vpop.f32.mrf.mxu0
    %v417 = vadd.f32 0.0, %v416
    %418 = vmatmul.f32.gmra.mxu0 %v297
    %v419 = vpop.f32.mrf.mxu0
    %v420 = vadd.f32 0.0, %v419
    %421 = vdwg.mxu0
    %422 = vmatpush.msra.mxu0 %v376
    %423 = vmatpush.msra.mxu0 %v375
    %424 = vmatpush.msra.mxu0 %v374
    %425 = vmatpush.msra.mxu0 %v373
    %426 = vmatpush.msra.mxu0 %v372
    %427 = vmatpush.msra.mxu0 %v371
    %428 = vmatpush.msra.mxu0 %v370
    %429 = vmatpush.msra.mxu0 %v369
    %430 = vmatpush.msra.mxu0 %v368
    %431 = vmatpush.msra.mxu0 %v367
    %432 = vmatpush.msra.mxu0 %v366
    %433 = vmatpush.msra.mxu0 %v365
    %434 = vmatpush.msra.mxu0 %v364
    %435 = vmatpush.msra.mxu0 %v363
    %436 = vmatpush.msra.mxu0 %v362
    %437 = vmatpush.msra.mxu0 %v361
    %438 = vmatmul.f32.gmra.mxu0 %v249
    %v439 = vpop.f32.mrf.mxu0
    %v440 = vadd.f32 %v411, %v439
    %441 = vmatmul.f32.gmra.mxu0 %v250
    %v442 = vpop.f32.mrf.mxu0
    %v443 = vadd.f32 %v414, %v442
    %444 = vmatmul.f32.gmra.mxu0 %v251
    %v445 = vpop.f32.mrf.mxu0
    %v446 = vadd.f32 %v417, %v445
    %447 = vmatmul.f32.gmra.mxu0 %v252
    %v448 = vpop.f32.mrf.mxu0
    %v449 = vadd.f32 %v420, %v448
    %450 = vdwg.mxu0
    %451 = vmatpush.msra.mxu0 %v392
    %452 = vmatpush.msra.mxu0 %v391
    %453 = vmatpush.msra.mxu0 %v390
    %454 = vmatpush.msra.mxu0 %v389
    %455 = vmatpush.msra.mxu0 %v388
    %456 = vmatpush.msra.mxu0 %v387
    %457 = vmatpush.msra.mxu0 %v386
    %458 = vmatpush.msra.mxu0 %v385
    %459 = vmatpush.msra.mxu0 %v384
    %460 = vmatpush.msra.mxu0 %v383
    %461 = vmatpush.msra.mxu0 %v382
    %462 = vmatpush.msra.mxu0 %v381
    %463 = vmatpush.msra.mxu0 %v380
    %464 = vmatpush.msra.mxu0 %v379
    %465 = vmatpush.msra.mxu0 %v378
    %466 = vmatpush.msra.mxu0 %v377
    %467 = vmatmul.f32.gmra.mxu0 %v334
    %v468 = vpop.f32.mrf.mxu0
    %v469 = vadd.f32 %v440, %v468
    %470 = vmatmul.f32.gmra.mxu0 %v337
    %v471 = vpop.f32.mrf.mxu0
    %v472 = vadd.f32 %v443, %v471
    %473 = vmatmul.f32.gmra.mxu0 %v340
    %v474 = vpop.f32.mrf.mxu0
    %v475 = vadd.f32 %v446, %v474
    %476 = vmatmul.f32.gmra.mxu0 %v343
    %v477 = vpop.f32.mrf.mxu0
    %v478 = vadd.f32 %v449, %v477
    %479 = vdwg.mxu0
    %480 = vrot.lane.b32.xlu0 %v469, 8
    %v481 = vpop.permute.xlu0 %480
    %482 = vrot.lane.b32.xlu0 %v472, 8
    %v483 = vpop.permute.xlu0 %482
    %484 = vrot.lane.b32.xlu0 %v475, 8
    %v485 = vpop.permute.xlu0 %484
    %486 = vrot.lane.b32.xlu0 %v478, 8
    %v487 = vpop.permute.xlu0 %486
    %v488 = vadd.f32 %v469, %v481
    %v489 = vadd.f32 %v472, %v483
    %v490 = vadd.f32 %v475, %v485
    %v491 = vadd.f32 %v478, %v487
    %492 = vrot.lane.b32.xlu0 %v488, 16
    %v493 = vpop.permute.xlu0 %492
    %494 = vrot.lane.b32.xlu0 %v489, 16
    %v495 = vpop.permute.xlu0 %494
    %496 = vrot.lane.b32.xlu0 %v490, 16
    %v497 = vpop.permute.xlu0 %496
    %498 = vrot.lane.b32.xlu0 %v491, 16
    %v499 = vpop.permute.xlu0 %498
    %v500 = vadd.f32 %v488, %v493
    %v501 = vadd.f32 %v489, %v495
    %v502 = vadd.f32 %v490, %v497
    %v503 = vadd.f32 %v491, %v499
    %504 = vrot.lane.b32.xlu0 %v500, 32
    %v505 = vpop.permute.xlu0 %504
    %506 = vrot.lane.b32.xlu0 %v501, 32
    %v507 = vpop.permute.xlu0 %506
    %508 = vrot.lane.b32.xlu0 %v502, 32
    %v509 = vpop.permute.xlu0 %508
    %510 = vrot.lane.b32.xlu0 %v503, 32
    %v511 = vpop.permute.xlu0 %510
    %v512 = vadd.f32 %v500, %v505
    %v513 = vadd.f32 %v501, %v507
    %v514 = vadd.f32 %v502, %v509
    %v515 = vadd.f32 %v503, %v511
    %516 = vrot.lane.b32.xlu0 %v512, 64
    %v517 = vpop.permute.xlu0 %516
    %518 = vrot.lane.b32.xlu0 %v513, 64
    %v519 = vpop.permute.xlu0 %518
    %520 = vrot.lane.b32.xlu0 %v514, 64
    %v521 = vpop.permute.xlu0 %520
    %522 = vrot.lane.b32.xlu0 %v515, 64
    %v523 = vpop.permute.xlu0 %522
    %v524 = vadd.f32 %v512, %v517
    %v525 = vadd.f32 %v513, %v519
    %v526 = vadd.f32 %v514, %v521
    %v527 = vadd.f32 %v515, %v523
    %v528 = vadd.f32 %v524, %v525
    %v529 = vadd.f32 %v528, %v526
    %v530 = vadd.f32 %v529, %v527
    %v531 = vrot.slane %v530, 4
    %v532 = vadd.f32 %v530, %v531
    %v533 = vrot.slane %v532, 2
    %v534 = vadd.f32 %v532, %v533
    %v535 = vrot.slane %v534, 1
    %v536 = vadd.f32 %v534, %v535
    %v537 = vmul.f32 %v536, 0.001953125
    %v538 = vsub.f32 %v469, %v537
    %v539 = vsub.f32 %v472, %v537
    %v540 = vsub.f32 %v475, %v537
    %v541 = vsub.f32 %v478, %v537
    %v542 = vmul.f32 %v538, %v538
    %v543 = vmul.f32 %v539, %v539
    %v544 = vmul.f32 %v540, %v540
    %v545 = vmul.f32 %v541, %v541
    %546 = vrot.lane.b32.xlu0 %v542, 8
    %v547 = vpop.permute.xlu0 %546
    %548 = vrot.lane.b32.xlu0 %v543, 8
    %v549 = vpop.permute.xlu0 %548
    %550 = vrot.lane.b32.xlu0 %v544, 8
    %v551 = vpop.permute.xlu0 %550
    %552 = vrot.lane.b32.xlu0 %v545, 8
    %v553 = vpop.permute.xlu0 %552
    %v554 = vadd.f32 %v542, %v547
    %v555 = vadd.f32 %v543, %v549
    %v556 = vadd.f32 %v544, %v551
    %v557 = vadd.f32 %v545, %v553
    %558 = vrot.lane.b32.xlu0 %v554, 16
    %v559 = vpop.permute.xlu0 %558
    %560 = vrot.lane.b32.xlu0 %v555, 16
    %v561 = vpop.permute.xlu0 %560
    %562 = vrot.lane.b32.xlu0 %v556, 16
    %v563 = vpop.permute.xlu0 %562
    %564 = vrot.lane.b32.xlu0 %v557, 16
    %v565 = vpop.permute.xlu0 %564
    %v566 = vadd.f32 %v554, %v559
    %v567 = vadd.f32 %v555, %v561
    %v568 = vadd.f32 %v556, %v563
    %v569 = vadd.f32 %v557, %v565
    %570 = vrot.lane.b32.xlu0 %v566, 32
    %v571 = vpop.permute.xlu0 %570
    %572 = vrot.lane.b32.xlu0 %v567, 32
    %v573 = vpop.permute.xlu0 %572
    %574 = vrot.lane.b32.xlu0 %v568, 32
    %v575 = vpop.permute.xlu0 %574
    %576 = vrot.lane.b32.xlu0 %v569, 32
    %v577 = vpop.permute.xlu0 %576
    %v578 = vadd.f32 %v566, %v571
    %v579 = vadd.f32 %v567, %v573
    %v580 = vadd.f32 %v568, %v575
    %v581 = vadd.f32 %v569, %v577
    %582 = vrot.lane.b32.xlu0 %v578, 64
    %v583 = vpop.permute.xlu0 %582
    %584 = vrot.lane.b32.xlu0 %v579, 64
    %v585 = vpop.permute.xlu0 %584
    %586 = vrot.lane.b32.xlu0 %v580, 64
    %v587 = vpop.permute.xlu0 %586
    %588 = vrot.lane.b32.xlu0 %v581, 64
    %v589 = vpop.permute.xlu0 %588
    %v590 = vadd.f32 %v578, %v583
    %v591 = vadd.f32 %v579, %v585
    %v592 = vadd.f32 %v580, %v587
    %v593 = vadd.f32 %v581, %v589
    %v594 = vadd.f32 %v590, %v591
    %v595 = vadd.f32 %v594, %v592
    %v596 = vadd.f32 %v595, %v593
    %v597 = vrot.slane %v596, 4
    %v598 = vadd.f32 %v596, %v597
    %v599 = vrot.slane %v598, 2
    %v600 = vadd.f32 %v598, %v599
    %v601 = vrot.slane %v600, 1
    %v602 = vadd.f32 %v600, %v601
    %v603 = vmul.f32 %v602, 0.001953125
    %v604 = vld [vmem:[%s6] sm:$0x1]
    %v605 = vadd.f32 %v603, 1e-05
    %v606 = vrsqrt.pop %v605
    %v607 = vmul.f32 %v606, %v605
    %v608 = vmul.f32 %v607, %v606
    %v609 = vmul.f32 0.5, %v608
    %v610 = vsub.f32 1.5, %v609
    %v611 = vmul.f32 %v606, %v610
    %vm612 = vweird.f32 %v605
    %vm613 = vweird.f32 %v606
    %vm614 = vmor %vm612, %vm613
    %v615 = vsel %vm614, %v606, %v611
    %v616 = vmul.f32 %v604, %v615
    %v618 = vperm.slane %v616, 0
    %v620 = vmul.f32 %v538, %v618
    %v621 = vmul.f32 %v539, %v618
    %v622 = vmul.f32 %v540, %v618
    %v623 = vmul.f32 %v541, %v618
    %v624 = vld [vmem:[%s7] sm:$0x1]
    %v626 = vperm.slane %v624, 0
    %v628 = vadd.f32 %v620, %v626
    %v629 = vadd.f32 %v621, %v626
    %v630 = vadd.f32 %v622, %v626
    %v631 = vadd.f32 %v623, %v626
    %v632 = vmax.f32 %v628, 0.0
    %v633 = vmax.f32 %v629, 0.0
    %v634 = vmax.f32 %v630, 0.0
    %v635 = vmax.f32 %v631, 0.0
    %636 = vmatpush.msra.mxu0 0.0
    %637 = vmatpush.msra.mxu0 0.0
    %638 = vmatpush.msra.mxu0 0.0
    %639 = vmatpush.msra.mxu0 0.0
    %640 = vmatpush.msra.mxu0 0.0
    %641 = vmatpush.msra.mxu0 0.0
    %642 = vmatpush.msra.mxu0 0.0
    %643 = vmatpush.msra.mxu0 0.0
    %644 = vmatpush.msra.mxu0 0.0
    %645 = vmatpush.msra.mxu0 0.0
    %646 = vmatpush.msra.mxu0 0.0
    %647 = vmatpush.msra.mxu0 0.0
    %648 = vmatpush.msra.mxu0 %v635
    %649 = vmatpush.msra.mxu0 %v634
    %650 = vmatpush.msra.mxu0 %v633
    %651 = vmatpush.msra.mxu0 %v632
    %652 = vmatmul.f32.gmra.mxu0 %v259
    %v653 = vpop.f32.mrf.mxu0
    %v654 = vadd.f32 0.0, %v653
    %655 = vmatmul.f32.gmra.mxu0 %v262
    %v656 = vpop.f32.mrf.mxu0
    %v657 = vadd.f32 0.0, %v656
    %658 = vmatmul.f32.gmra.mxu0 %v265
    %v659 = vpop.f32.mrf.mxu0
    %v660 = vadd.f32 0.0, %v659
    %661 = vmatmul.f32.gmra.mxu0 %v268
    %v662 = vpop.f32.mrf.mxu0
    %v663 = vadd.f32 0.0, %v662
    %664 = vdwg.mxu0
    %665 = vmatpush.msra.mxu0 0.0
    %666 = vmatpush.msra.mxu0 0.0
    %667 = vmatpush.msra.mxu0 0.0
    %668 = vmatpush.msra.mxu0 0.0
    %669 = vmatpush.msra.mxu0 0.0
    %670 = vmatpush.msra.mxu0 0.0
    %671 = vmatpush.msra.mxu0 0.0
    %672 = vmatpush.msra.mxu0 0.0
    %673 = vmatpush.msra.mxu0 0.0
    %674 = vmatpush.msra.mxu0 0.0
    %675 = vmatpush.msra.mxu0 0.0
    %676 = vmatpush.msra.mxu0 0.0
    %677 = vmatpush.msra.mxu0 %v635
    %678 = vmatpush.msra.mxu0 %v634
    %679 = vmatpush.msra.mxu0 %v633
    %680 = vmatpush.msra.mxu0 %v632
    %681 = vmatmul.f32.gmra.mxu0 %v305
    %v682 = vpop.f32.mrf.mxu0
    %v683 = vadd.f32 0.0, %v682
    %684 = vmatmul.f32.gmra.mxu0 %v308
    %v685 = vpop.f32.mrf.mxu0
    %v686 = vadd.f32 0.0, %v685
    %687 = vmatmul.f32.gmra.mxu0 %v311
    %v688 = vpop.f32.mrf.mxu0
    %v689 = vadd.f32 0.0, %v688
    %690 = vmatmul.f32.gmra.mxu0 %v314
    %v691 = vpop.f32.mrf.mxu0
    %v692 = vadd.f32 0.0, %v691
    %693 = vdwg.mxu0
    %v694 = vld [vmem:[#allocation8] sm:$0xff]
    %v695 = vld [vmem:[#allocation8 + $0x8] sm:$0xff]
    %v696 = vld [vmem:[#allocation8 + $0x10] sm:$0xff]
    %v697 = vld [vmem:[#allocation8 + $0x18] sm:$0xff]
    %v698 = vld [vmem:[#allocation8 + $0x20] sm:$0xff]
    %v699 = vld [vmem:[#allocation8 + $0x28] sm:$0xff]
    %v700 = vld [vmem:[#allocation8 + $0x30] sm:$0xff]
    %v701 = vld [vmem:[#allocation8 + $0x38] sm:$0xff]
    %v702 = vld [vmem:[#allocation8 + $0x40] sm:$0xff]
    %v703 = vld [vmem:[#allocation8 + $0x48] sm:$0xff]
    %v704 = vld [vmem:[#allocation8 + $0x50] sm:$0xff]
    %v705 = vld [vmem:[#allocation8 + $0x58] sm:$0xff]
    %v706 = vld [vmem:[#allocation8 + $0x60] sm:$0xff]
    %v707 = vld [vmem:[#allocation8 + $0x68] sm:$0xff]
    %v708 = vld [vmem:[#allocation8 + $0x70] sm:$0xff]
    %v709 = vld [vmem:[#allocation8 + $0x78] sm:$0xff]
    %v710 = vld [vmem:[#allocation8 + $0x80] sm:$0xff]
    %v711 = vld [vmem:[#allocation8 + $0x88] sm:$0xff]
    %v712 = vld [vmem:[#allocation8 + $0x90] sm:$0xff]
    %v713 = vld [vmem:[#allocation8 + $0x98] sm:$0xff]
    %v714 = vld [vmem:[#allocation8 + $0xa0] sm:$0xff]
    %v715 = vld [vmem:[#allocation8 + $0xa8] sm:$0xff]
    %v716 = vld [vmem:[#allocation8 + $0xb0] sm:$0xff]
    %v717 = vld [vmem:[#allocation8 + $0xb8] sm:$0xff]
    %v718 = vld [vmem:[#allocation8 + $0xc0] sm:$0xff]
    %v719 = vld [vmem:[#allocation8 + $0xc8] sm:$0xff]
    %v720 = vld [vmem:[#allocation8 + $0xd0] sm:$0xff]
    %v721 = vld [vmem:[#allocation8 + $0xd8] sm:$0xff]
    %v722 = vld [vmem:[#allocation8 + $0xe0] sm:$0xff]
    %v723 = vld [vmem:[#allocation8 + $0xe8] sm:$0xff]
    %v724 = vld [vmem:[#allocation8 + $0xf0] sm:$0xff]
    %v725 = vld [vmem:[#allocation8 + $0xf8] sm:$0xff]
    %v726 = vld [vmem:[#allocation8 + $0x100] sm:$0xff]
    %v727 = vld [vmem:[#allocation8 + $0x108] sm:$0xff]
    %v728 = vld [vmem:[#allocation8 + $0x110] sm:$0xff]
    %v729 = vld [vmem:[#allocation8 + $0x118] sm:$0xff]
    %v730 = vld [vmem:[#allocation8 + $0x120] sm:$0xff]
    %v731 = vld [vmem:[#allocation8 + $0x128] sm:$0xff]
    %v732 = vld [vmem:[#allocation8 + $0x130] sm:$0xff]
    %v733 = vld [vmem:[#allocation8 + $0x138] sm:$0xff]
    %v734 = vld [vmem:[#allocation8 + $0x140] sm:$0xff]
    %v735 = vld [vmem:[#allocation8 + $0x148] sm:$0xff]
    %v736 = vld [vmem:[#allocation8 + $0x150] sm:$0xff]
    %v737 = vld [vmem:[#allocation8 + $0x158] sm:$0xff]
    %v738 = vld [vmem:[#allocation8 + $0x160] sm:$0xff]
    %v739 = vld [vmem:[#allocation8 + $0x168] sm:$0xff]
    %v740 = vld [vmem:[#allocation8 + $0x170] sm:$0xff]
    %v741 = vld [vmem:[#allocation8 + $0x178] sm:$0xff]
    %742 = vmatpush.msra.mxu0 %v709
    %743 = vmatpush.msra.mxu0 %v708
    %744 = vmatpush.msra.mxu0 %v707
    %745 = vmatpush.msra.mxu0 %v706
    %746 = vmatpush.msra.mxu0 %v705
    %747 = vmatpush.msra.mxu0 %v704
    %748 = vmatpush.msra.mxu0 %v703
    %749 = vmatpush.msra.mxu0 %v702
    %750 = vmatpush.msra.mxu0 %v701
    %751 = vmatpush.msra.mxu0 %v700
    %752 = vmatpush.msra.mxu0 %v699
    %753 = vmatpush.msra.mxu0 %v698
    %754 = vmatpush.msra.mxu0 %v697
    %755 = vmatpush.msra.mxu0 %v696
    %756 = vmatpush.msra.mxu0 %v695
    %757 = vmatpush.msra.mxu0 %v694
    %758 = vmatmul.f32.gmra.mxu0 %v654
    %v759 = vpop.f32.mrf.mxu0
    %v760 = vadd.f32 %v93, %v759
    %761 = vmatmul.f32.gmra.mxu0 %v657
    %v762 = vpop.f32.mrf.mxu0
    %v763 = vadd.f32 %v94, %v762
    %764 = vmatmul.f32.gmra.mxu0 %v660
    %v765 = vpop.f32.mrf.mxu0
    %v766 = vadd.f32 %v95, %v765
    %767 = vmatmul.f32.gmra.mxu0 %v663
    %v768 = vpop.f32.mrf.mxu0
    %v769 = vadd.f32 %v96, %v768
    %770 = vdwg.mxu0
    %771 = vmatpush.msra.mxu0 %v725
    %772 = vmatpush.msra.mxu0 %v724
    %773 = vmatpush.msra.mxu0 %v723
    %774 = vmatpush.msra.mxu0 %v722
    %775 = vmatpush.msra.mxu0 %v721
    %776 = vmatpush.msra.mxu0 %v720
    %777 = vmatpush.msra.mxu0 %v719
    %778 = vmatpush.msra.mxu0 %v718
    %779 = vmatpush.msra.mxu0 %v717
    %780 = vmatpush.msra.mxu0 %v716
    %781 = vmatpush.msra.mxu0 %v715
    %782 = vmatpush.msra.mxu0 %v714
    %783 = vmatpush.msra.mxu0 %v713
    %784 = vmatpush.msra.mxu0 %v712
    %785 = vmatpush.msra.mxu0 %v711
    %786 = vmatpush.msra.mxu0 %v710
    %787 = vmatmul.f32.gmra.mxu0 %v632
    %v788 = vpop.f32.mrf.mxu0
    %v789 = vadd.f32 %v760, %v788
    %790 = vmatmul.f32.gmra.mxu0 %v633
    %v791 = vpop.f32.mrf.mxu0
    %v792 = vadd.f32 %v763, %v791
    %793 = vmatmul.f32.gmra.mxu0 %v634
    %v794 = vpop.f32.mrf.mxu0
    %v795 = vadd.f32 %v766, %v794
    %796 = vmatmul.f32.gmra.mxu0 %v635
    %v797 = vpop.f32.mrf.mxu0
    %v798 = vadd.f32 %v769, %v797
    %799 = vdwg.mxu0
    %800 = vmatpush.msra.mxu0 %v741
    %801 = vmatpush.msra.mxu0 %v740
    %802 = vmatpush.msra.mxu0 %v739
    %803 = vmatpush.msra.mxu0 %v738
    %804 = vmatpush.msra.mxu0 %v737
    %805 = vmatpush.msra.mxu0 %v736
    %806 = vmatpush.msra.mxu0 %v735
    %807 = vmatpush.msra.mxu0 %v734
    %808 = vmatpush.msra.mxu0 %v733
    %809 = vmatpush.msra.mxu0 %v732
    %810 = vmatpush.msra.mxu0 %v731
    %811 = vmatpush.msra.mxu0 %v730
    %812 = vmatpush.msra.mxu0 %v729
    %813 = vmatpush.msra.mxu0 %v728
    %814 = vmatpush.msra.mxu0 %v727
    %815 = vmatpush.msra.mxu0 %v726
    %816 = vmatmul.f32.gmra.mxu0 %v683
    %v817 = vpop.f32.mrf.mxu0
    %v818 = vadd.f32 %v789, %v817
    %819 = vmatmul.f32.gmra.mxu0 %v686
    %v820 = vpop.f32.mrf.mxu0
    %v821 = vadd.f32 %v792, %v820
    %822 = vmatmul.f32.gmra.mxu0 %v689
    %v823 = vpop.f32.mrf.mxu0
    %v824 = vadd.f32 %v795, %v823
    %825 = vmatmul.f32.gmra.mxu0 %v692
    %v826 = vpop.f32.mrf.mxu0
    %v827 = vadd.f32 %v798, %v826
    %828 = vdwg.mxu0
    %829 = vst [vmem:[#allocation10] sm:$0xff] %v818
    %830 = vst [vmem:[#allocation10 + $0x8] sm:$0xff] %v821
    %831 = vst [vmem:[#allocation10 + $0x10] sm:$0xff] %v824
    %832 = vst [vmem:[#allocation10 + $0x18] sm:$0xff] %v827
    // Predicated region
    $region50: #{tpu_custom_call.1} parent=1 // pred_check
      _
    $region51: #{tpu_custom_call.1} parent=1 // pred_check_branch
      %834 = sbr.rel (0) target = $region53
    $region52: #{tpu_custom_call.1} parent=1 // pred_region
      %836 = vsyncadd [#allocation4], 0
      %s837 = sshll.u32 [#allocation10], 4
      %s838 = int_to_ptr.vmem [resolvable:$true] %s837
      %s839 = sshll.u32 %s8, 4
      %s840 = int_to_ptr.hbm [resolvable:$true] %s839
      %845 = dma.vmem_to_hbm [thread:$0]  %s838, 512, %s840, [#allocation4], 128, 128, 8
    $region53: #{tpu_custom_call.1} parent=1 // pred_fallthru
      _
    // Predicated region
    $region54: #{tpu_custom_call.1} parent=1 // pred_check
      _
    $region55: #{tpu_custom_call.1} parent=1 // pred_check_branch
      %847 = sbr.rel (0) target = $region57
    $region56: #{tpu_custom_call.1} parent=1 // pred_region
      %849 = dma.done [#allocation4], 512
    $region57: #{tpu_custom_call.1} parent=1 // pred_fallthru
      _
    %850 = vsyncpa [#allocation3], 1
    %851 = vsyncpa [#allocation6], 1
    %852 = vsyncpa [#allocation9], 1
    %853 = vsyncpa [#allocation4], 1

</llo_original>
